<compile_context>
chip_gen: v7x
topology: tpu7x:2x2x1
jax: 0.10.0
libtpu: 0.0.40
codegen_flags: <defaults>
</compile_context>

<pallas_src>
import math

import jax
import jax.numpy as jnp
from jax.experimental import pallas as pl
from jax.experimental.pallas import tpu as pltpu


def _estimation_gate_kernel(month_ref, year_ref, hist_ref,
                            w1m_ref, w1y_ref, nbias_ref, w2_ref, b2_ref,
                            out_ref):
    # month_ref/year_ref : [te, t]   time features, rows on the lane axis
    # hist_ref/out_ref   : [C,  t]   history channels / gated output
    # w1m_ref/w1y_ref    : [H, te]   fc1 weight slices (transposed)
    # nbias_ref          : [H,  t]   per-node fc1 bias, pre-tiled over rows
    # w2_ref             : [1,  H]   fc2 weight row
    # b2_ref             : [1,  1]   fc2 bias
    month = month_ref[...].astype(jnp.float32)
    year = year_ref[...].astype(jnp.float32)

    # fc1: two tiny-K MXU matmuls over the streamed time features plus the
    # precomputed node-embedding bias, then ReLU.
    h = jnp.dot(w1m_ref[...], month, preferred_element_type=jnp.float32)
    h = h + jnp.dot(w1y_ref[...], year, preferred_element_type=jnp.float32)
    h = h + nbias_ref[...]
    h = jnp.maximum(h, 0.0)                                         # [H, t]

    # fc2 (output dim 1) as a [1,H] @ [H,t] matmul, then the sigmoid gate.
    logit = jnp.dot(w2_ref[...], h,
                    preferred_element_type=jnp.float32) + b2_ref[...]
    gate = jax.nn.sigmoid(logit)                                    # [1, t]

    # Gate broadcasts over the C history channels (sublane broadcast); store
    # is a lane-dense [C, t] block.
    out_ref[...] = (hist_ref[...].astype(jnp.float32) * gate).astype(out_ref.dtype)


def _choose_row_tile(M, N, target):
    """Rows (lanes) per grid step.

    Must be a multiple of N (row index cycles through nodes with period N, so
    the pre-tiled node bias lines up) and of 128 (lane tiling rule), close to
    `target`, and capped so the parallel grid keeps >= 2 steps when possible
    (both v7x TensorCores get work)."""
    unit = N * 128 // math.gcd(N, 128)                  # lcm(N, 128)
    if unit >= M:
        return M                                        # one full-width block
    t = max(unit, (target // unit) * unit)
    half = max(unit, (M // (2 * unit)) * unit)
    return min(t, half)


def estimation_gate(node_embedding_u, node_embedding_d,
                    time_in_month_feat, time_in_year_feat,
                    history_data, params, *, block_rows=4096):
    """Pallas implementation of EstimationGate.forward.

    params = (w1, b1, w2, b2) with w1 laid out as fc1.weight.T : [D_in, H],
    D_in = 2*time_emb_dim + 2*node_emb_dim, feature order [month, year, u, d].
    """
    w1, b1, w2, b2 = params
    B, L, N, te = time_in_month_feat.shape
    L_hist = history_data.shape[1]
    C = history_data.shape[-1]
    ne = node_embedding_u.shape[-1]
    H = w1.shape[-1]
    assert L >= L_hist
    assert w1.shape[0] == 2 * te + 2 * ne

    M = B * L_hist * N
    t = _choose_row_tile(M, N, block_rows)
    grid = (pl.cdiv(M, t),)   # tail block (if any) is clipped/masked by Pallas

    f32 = jnp.float32
    hi = jax.lax.Precision.HIGHEST

    # ---- fold the static node-embedding part of fc1 into a per-node bias ----
    w1f = w1.astype(f32)
    w1m_t = w1f[:te].T                                   # [H, te]
    w1y_t = w1f[te:2 * te].T                             # [H, te]
    w1u = w1f[2 * te:2 * te + ne]                        # [ne, H]
    w1d = w1f[2 * te + ne:]                              # [ne, H]
    node_bias = (jnp.dot(node_embedding_u.astype(f32), w1u, precision=hi)
                 + jnp.dot(node_embedding_d.astype(f32), w1d, precision=hi)
                 + b1.astype(f32)[None, :])              # [N, H]
    # Rows flatten as (b, l, n): node index has period N and every tile starts
    # at a multiple of N, so the bias can be pre-tiled over one tile of rows.
    nbias_tile = jnp.tile(node_bias.T, (1, t // N))      # [H, t]

    w2_row = w2.reshape(1, H).astype(f32)                # [1, H]
    b2_2d = jnp.asarray(b2, f32).reshape(1, 1)           # [1, 1]

    # ---- lane-dense (rows-on-lanes) views of the streamed tensors -----------
    # Slice the gate features to the last L_hist steps up front; identical to
    # the reference's post-sigmoid slice since rows are independent.
    if L != L_hist:
        time_in_month_feat = time_in_month_feat[:, L - L_hist:]
        time_in_year_feat = time_in_year_feat[:, L - L_hist:]
    month_t = time_in_month_feat.reshape(M, te).T        # [te, M]
    year_t = time_in_year_feat.reshape(M, te).T          # [te, M]
    hist_t = history_data.reshape(M, C).T                # [C,  M]

    out_t = pl.pallas_call(
        _estimation_gate_kernel,
        out_shape=jax.ShapeDtypeStruct((C, M), history_data.dtype),
        grid_spec=pltpu.PrefetchScalarGridSpec(
            num_scalar_prefetch=0,
            grid=grid,
            in_specs=[
                pl.BlockSpec((te, t), lambda i: (0, i)),   # month time feats
                pl.BlockSpec((te, t), lambda i: (0, i)),   # year time feats
                pl.BlockSpec((C, t),  lambda i: (0, i)),   # history rows
                pl.BlockSpec((H, te), lambda i: (0, 0)),   # fc1 W (month part)
                pl.BlockSpec((H, te), lambda i: (0, 0)),   # fc1 W (year part)
                pl.BlockSpec((H, t),  lambda i: (0, 0)),   # per-node fc1 bias
                pl.BlockSpec((1, H),  lambda i: (0, 0)),   # fc2 weight
                pl.BlockSpec((1, 1),  lambda i: (0, 0)),   # fc2 bias
            ],
            out_specs=pl.BlockSpec((C, t), lambda i: (0, i)),
        ),
        compiler_params=pltpu.CompilerParams(
            dimension_semantics=("parallel",)),
    )(month_t, year_t, hist_t, w1m_t, w1y_t, nbias_tile, w2_row, b2_2d)

    return out_t.T.reshape(B, L_hist, N, C)


def _reference(node_u, node_d, t_month, t_year, hist, params):
    """Pure-JAX reference matching the PyTorch forward exactly."""
    w1, b1, w2, b2 = params
    hi = jax.lax.Precision.HIGHEST
    B, L, N, _ = t_month.shape
    u = jnp.broadcast_to(node_u[None, None], (B, L, N, node_u.shape[-1]))
    d = jnp.broadcast_to(node_d[None, None], (B, L, N, node_d.shape[-1]))
    feat = jnp.concatenate([t_month, t_year, u, d], axis=-1)
    hidden = jnp.maximum(jnp.dot(feat, w1, precision=hi) + b1, 0.0)
    logit = jnp.dot(hidden, w2[:, None], precision=hi) + b2
    gate = jax.nn.sigmoid(logit)[:, -hist.shape[1]:, :, :]
    return hist * gate


if __name__ == "__main__":
    # Small deterministic shapes consistent with the module (hidden_dim=64,
    # time_emb_dim=4 from the spec; L > L_hist exercises the time slice).
    node_emb_dim = 8
    time_emb_dim = 4
    hidden_dim = 64
    B, L, L_hist, N, C = 2, 10, 8, 16, 3
    D_in = 2 * node_emb_dim + 2 * time_emb_dim

    key = jax.random.PRNGKey(0)
    ks = jax.random.split(key, 9)
    node_u  = jax.random.normal(ks[0], (N, node_emb_dim), jnp.float32)
    node_d  = jax.random.normal(ks[1], (N, node_emb_dim), jnp.float32)
    t_month = jax.random.normal(ks[2], (B, L, N, time_emb_dim), jnp.float32)
    t_year  = jax.random.normal(ks[3], (B, L, N, time_emb_dim), jnp.float32)
    hist    = jax.random.normal(ks[4], (B, L_hist, N, C), jnp.float32)

    # Deterministic parameter init (fc1.weight.T layout: [D_in, H]).
    w1 = jax.random.normal(ks[5], (D_in, hidden_dim), jnp.float32) * 0.1
    b1 = jax.random.normal(ks[6], (hidden_dim,), jnp.float32) * 0.1
    w2 = jax.random.normal(ks[7], (hidden_dim,), jnp.float32) * 0.1
    b2 = jax.random.normal(ks[8], (), jnp.float32) * 0.1
    params = (w1, b1, w2, b2)

    out = estimation_gate(node_u, node_d, t_month, t_year, hist, params)
    out = jax.block_until_ready(out)

    ref = _reference(node_u, node_d, t_month, t_year, hist, params)
    assert out.shape == (B, L_hist, N, C)
    assert out.dtype == hist.dtype
    assert jnp.allclose(out, ref, atol=2e-3, rtol=2e-3)

    print("KERNEL_OK")
</pallas_src>

<mosaic_0001>
module attributes {stable_mosaic.version = 11 : i64} {
  func.func @_estimation_gate_kernel(%arg0: i32, %arg1: memref<4x128xf32, #tpu.memory_space<vmem>>, %arg2: memref<4x128xf32, #tpu.memory_space<vmem>>, %arg3: memref<3x128xf32, #tpu.memory_space<vmem>>, %arg4: memref<64x4xf32, #tpu.memory_space<vmem>>, %arg5: memref<64x4xf32, #tpu.memory_space<vmem>>, %arg6: memref<64x128xf32, #tpu.memory_space<vmem>>, %arg7: memref<1x64xf32, #tpu.memory_space<vmem>>, %arg8: memref<1x1xf32, #tpu.memory_space<vmem>>, %arg9: memref<3x128xf32, #tpu.memory_space<vmem>>) attributes {dimension_semantics = [#tpu.dimension_semantics<parallel>], iteration_bounds = array<i64: 2>, scalar_prefetch = 0 : i64, scratch_operands = 0 : i64, tpu.core_type = #tpu.core_type<tc>, window_params = [{transform_indices = @transform_0, window_bounds = array<i64: 4, 128>}, {transform_indices = @transform_1, window_bounds = array<i64: 4, 128>}, {transform_indices = @transform_2, window_bounds = array<i64: 3, 128>}, {pipeline_mode = #tpu.pipeline_mode<synchronous>, transform_indices = @transform_3, window_bounds = array<i64: 64, 4>}, {pipeline_mode = #tpu.pipeline_mode<synchronous>, transform_indices = @transform_4, window_bounds = array<i64: 64, 4>}, {pipeline_mode = #tpu.pipeline_mode<synchronous>, transform_indices = @transform_5, window_bounds = array<i64: 64, 128>}, {pipeline_mode = #tpu.pipeline_mode<synchronous>, transform_indices = @transform_6, window_bounds = array<i64: 1, 64>}, {pipeline_mode = #tpu.pipeline_mode<synchronous>, transform_indices = @transform_7, window_bounds = array<i64: 1, 1>}, {transform_indices = @transform_8, window_bounds = array<i64: 3, 128>}]} {
    %c0 = arith.constant 0 : index
    %c0_0 = arith.constant 0 : index
    %0 = vector.load %arg1[%c0, %c0_0] : memref<4x128xf32, #tpu.memory_space<vmem>>, vector<4x128xf32>
    %c0_1 = arith.constant 0 : index
    %c0_2 = arith.constant 0 : index
    %1 = vector.load %arg2[%c0_1, %c0_2] : memref<4x128xf32, #tpu.memory_space<vmem>>, vector<4x128xf32>
    %c0_3 = arith.constant 0 : index
    %c0_4 = arith.constant 0 : index
    %2 = vector.load %arg4[%c0_3, %c0_4] : memref<64x4xf32, #tpu.memory_space<vmem>>, vector<64x4xf32>
    %cst = arith.constant dense<0.000000e+00> : vector<64x128xf32>
    %3 = tpu.matmul %2, %0, %cst {dimension_numbers = #tpu.dot_dimension_numbers<[1], [0], [0], [1], [0, 0, 1, 1], [], []>} : vector<64x4xf32>, vector<4x128xf32>, vector<64x128xf32> -> vector<64x128xf32>
    %c0_5 = arith.constant 0 : index
    %c0_6 = arith.constant 0 : index
    %4 = vector.load %arg5[%c0_5, %c0_6] : memref<64x4xf32, #tpu.memory_space<vmem>>, vector<64x4xf32>
    %cst_7 = arith.constant dense<0.000000e+00> : vector<64x128xf32>
    %5 = tpu.matmul %4, %1, %cst_7 {dimension_numbers = #tpu.dot_dimension_numbers<[1], [0], [0], [1], [0, 0, 1, 1], [], []>} : vector<64x4xf32>, vector<4x128xf32>, vector<64x128xf32> -> vector<64x128xf32>
    %6 = arith.addf %3, %5 : vector<64x128xf32>
    %c0_8 = arith.constant 0 : index
    %c0_9 = arith.constant 0 : index
    %7 = vector.load %arg6[%c0_8, %c0_9] : memref<64x128xf32, #tpu.memory_space<vmem>>, vector<64x128xf32>
    %8 = arith.addf %6, %7 : vector<64x128xf32>
    %cst_10 = arith.constant 0.000000e+00 : f32
    %9 = vector.broadcast %cst_10 : f32 to vector<64x128xf32>
    %10 = arith.maximumf %8, %9 : vector<64x128xf32>
    %c0_11 = arith.constant 0 : index
    %c0_12 = arith.constant 0 : index
    %11 = vector.load %arg7[%c0_11, %c0_12] : memref<1x64xf32, #tpu.memory_space<vmem>>, vector<1x64xf32>
    %cst_13 = arith.constant dense<0.000000e+00> : vector<1x128xf32>
    %12 = tpu.matmul %11, %10, %cst_13 {dimension_numbers = #tpu.dot_dimension_numbers<[1], [0], [0], [1], [0, 0, 1, 1], [], []>} : vector<1x64xf32>, vector<64x128xf32>, vector<1x128xf32> -> vector<1x128xf32>
    %c0_14 = arith.constant 0 : index
    %c0_15 = arith.constant 0 : index
    %13 = vector.load %arg8[%c0_14, %c0_15] : memref<1x1xf32, #tpu.memory_space<vmem>>, vector<1x1xf32>
    %14 = vector.broadcast %13 : vector<1x1xf32> to vector<1x128xf32>
    %15 = arith.addf %12, %14 : vector<1x128xf32>
    %16 = arith.negf %15 : vector<1x128xf32>
    %17 = math.exp %16 : vector<1x128xf32>
    %cst_16 = arith.constant 1.000000e+00 : f32
    %18 = vector.broadcast %cst_16 : f32 to vector<1x128xf32>
    %19 = arith.addf %18, %17 : vector<1x128xf32>
    %20 = arith.divf %18, %19 : vector<1x128xf32>
    %c0_17 = arith.constant 0 : index
    %c0_18 = arith.constant 0 : index
    %21 = vector.load %arg3[%c0_17, %c0_18] : memref<3x128xf32, #tpu.memory_space<vmem>>, vector<3x128xf32>
    %22 = vector.broadcast %20 : vector<1x128xf32> to vector<3x128xf32>
    %23 = arith.mulf %21, %22 : vector<3x128xf32>
    %c0_19 = arith.constant 0 : index
    %c0_20 = arith.constant 0 : index
    %24 = vector.load %arg9[%c0_19, %c0_20] : memref<3x128xf32, #tpu.memory_space<vmem>>, vector<3x128xf32>
    tpu.vector_store %arg9[%c0_19, %c0_20], %23 {strides = array<i32>} : memref<3x128xf32, #tpu.memory_space<vmem>>, vector<3x128xf32>,
    return
  }
  func.func @transform_0(%arg0: i32) -> (i32, i32) {
    %c0_i32 = arith.constant 0 : i32
    %c0_i32_0 = arith.constant 0 : i32
    return %c0_i32, %arg0 : i32, i32
  }
  func.func @transform_1(%arg0: i32) -> (i32, i32) {
    %c0_i32 = arith.constant 0 : i32
    %c0_i32_0 = arith.constant 0 : i32
    return %c0_i32, %arg0 : i32, i32
  }
  func.func @transform_2(%arg0: i32) -> (i32, i32) {
    %c0_i32 = arith.constant 0 : i32
    %c0_i32_0 = arith.constant 0 : i32
    return %c0_i32, %arg0 : i32, i32
  }
  func.func @transform_3(%arg0: i32) -> (i32, i32) {
    %c0_i32 = arith.constant 0 : i32
    %c0_i32_0 = arith.constant 0 : i32
    %c0_i32_1 = arith.constant 0 : i32
    return %c0_i32, %c0_i32_0 : i32, i32
  }
  func.func @transform_4(%arg0: i32) -> (i32, i32) {
    %c0_i32 = arith.constant 0 : i32
    %c0_i32_0 = arith.constant 0 : i32
    %c0_i32_1 = arith.constant 0 : i32
    return %c0_i32, %c0_i32_0 : i32, i32
  }
  func.func @transform_5(%arg0: i32) -> (i32, i32) {
    %c0_i32 = arith.constant 0 : i32
    %c0_i32_0 = arith.constant 0 : i32
    %c0_i32_1 = arith.constant 0 : i32
    return %c0_i32, %c0_i32_0 : i32, i32
  }
  func.func @transform_6(%arg0: i32) -> (i32, i32) {
    %c0_i32 = arith.constant 0 : i32
    %c0_i32_0 = arith.constant 0 : i32
    %c0_i32_1 = arith.constant 0 : i32
    return %c0_i32, %c0_i32_0 : i32, i32
  }
  func.func @transform_7(%arg0: i32) -> (i32, i32) {
    %c0_i32 = arith.constant 0 : i32
    %c0_i32_0 = arith.constant 0 : i32
    %c0_i32_1 = arith.constant 0 : i32
    return %c0_i32, %c0_i32_0 : i32, i32
  }
  func.func @transform_8(%arg0: i32) -> (i32, i32) {
    %c0_i32 = arith.constant 0 : i32
    %c0_i32_0 = arith.constant 0 : i32
    return %c0_i32, %arg0 : i32, i32
  }
}

</mosaic_0001>

<llo_original>
// kernel: tpu_custom_call.1
$region0: #{tpu_custom_call.1}
  #allocation0 [shape = 'u32[]', space=smem, size = 0x4, offset = 0x4, fixed_abs, tag = 'smem constant byte address 0x4 - core index']
  #allocation1 [shape = 'u32[144,128]{1,0:T(1,128)}', space=vmem, size = 0x12000, scoped, tag = 'internal scratch']
  #allocation2 [shape = 'f32[1,1]{1,0:T(1,128)S(1)}', space=vmem, size = 0x200, scoped, tag = 'scoped memory for tpu_custom_call.1']
  %s0 = inlined_call_operand.vmem [shape: f32[4,256], index: 0, kind: input, shape index: {}]
  %s1 = inlined_call_operand.vmem [shape: f32[4,256], index: 1, kind: input, shape index: {}]
  %s2 = inlined_call_operand.vmem [shape: f32[3,256], index: 2, kind: input, shape index: {}]
  %s3 = inlined_call_operand.vmem [shape: f32[64,4], index: 3, kind: input, shape index: {}]
  %s4 = inlined_call_operand.vmem [shape: f32[64,4], index: 4, kind: input, shape index: {}]
  %s5 = inlined_call_operand.vmem [shape: f32[64,128], index: 5, kind: input, shape index: {}]
  %s6 = inlined_call_operand.vmem [shape: f32[1,64], index: 6, kind: input, shape index: {}]
  %s7 = inlined_call_operand.<no memory space> [shape: f32[1,1], index: 7, kind: input, shape index: {}]
  %s8 = inlined_call_operand.hbm [shape: f32[3,256], index: 8, kind: output, shape index: {}]
  %s9 = sld [smem:[#allocation0]]
  $region65: #{tpu_custom_call.1} parent=0
    _
  %s11 = ssub.s32 1, %s9
  %s12 = scalar_select 0, %s11, %s9
  %v13 = vstv %s7
  %14 = vst [vmem:[#allocation2] sm:$0x1] %v13
  $region1: #{tpu_custom_call.1} parent=0
    #allocation3 [shape = 'u8[4096]{0}', space=vmem, size = 0x1000, scoped, tag = 'output window, operand 0']
    #allocation4 [shape = 's32[2]{0}', space=sflag, size = 0x8, scoped, tag = 'scoped memory for tpu_custom_call.1']
    %15 = vsyncpa [#allocation4], 0
    %s16 = scalar_lea.sflag [#allocation4], 1
    %17 = vsyncpa %s16, 0
    loop: start=0, step=1, limit=4
    $region2: #{tpu_custom_call.1} parent=1 // loop_pre_header
      _
    $region3: #{tpu_custom_call.1} parent=1 // loop_header
      %s19 = sphi 0, %s23
      %p20 = scmp.ge.s32.totalorder %s19, 4
      %s29 = sphi 0, %s31
      %s32 = sphi 0, %s29
      %s33 = sphi 0, %s32
      %s49 = sphi 0, %s33
      %s55 = sphi 0, %s57
      %s58 = sphi 0, %s55
      %s59 = sphi 0, %s58
      %s75 = sphi 0, %s59
      %s81 = sphi 0, %s83
      %s84 = sphi 0, %s81
      %s85 = sphi 0, %s84
      %s101 = sphi 0, %s85
      %s105 = sphi 0, %s105
      %s107 = sphi 0, %s105
      %s108 = sphi 0, %s107
      %s122 = sphi 0, %s108
      %s126 = sphi 0, %s126
      %s128 = sphi 0, %s126
      %s129 = sphi 0, %s128
      %s143 = sphi 0, %s129
      %s147 = sphi 0, %s147
      %s149 = sphi 0, %s147
      %s150 = sphi 0, %s149
      %s164 = sphi 0, %s150
      %s168 = sphi 0, %s168
      %s170 = sphi 0, %s168
      %s171 = sphi 0, %s170
      %s185 = sphi 0, %s171
      %s189 = sphi 0, %s189
      %s191 = sphi 0, %s189
      %s192 = sphi 0, %s191
      %s206 = sphi 0, %s192
      %s212 = sphi 0, %s214
      %s215 = sphi 0, %s212
      %s216 = sphi 0, %s215
      %s232 = sphi 0, %s216
    $region4: #{tpu_custom_call.1} parent=1 // loop_header_branch
      %22 = sbr.rel (%p20) target = $region8
    $region5: #{tpu_custom_call.1} parent=1 // loop_body
      %s24 = ssub.s32 %s19, 1
      %s25 = ssub.s32 %s19, 2
      %s26 = sadd.s32 %s19, 1
      %s27 = ssub.s32 %s19, %s26
      %p28 = scmp.eq.s32.totalorder %s27, 0
      %s30 = sadd.s32 %s29, 1
      %s31 = scalar_select %p28, %s29, %s30
      %p34 = pneg %p28
      %p35 = scmp.eq.s32.totalorder %s19, 1
      %p36 = por %p34, %p35
      %p37 = scmp.ne.s32.totalorder %s29, %s32
      %p38 = scmp.eq.s32.totalorder %s19, 0
      %p39 = por %p37, %p38
      %p40 = scmp.ne.s32.totalorder %s29, %s32
      %p41 = scmp.eq.s32.totalorder %s24, 1
      %p42 = por %p40, %p41
      %p43 = scmp.ne.s32.totalorder %s32, %s33
      %p44 = scmp.eq.s32.totalorder %s24, 0
      %p45 = por %p43, %p44
      %p46 = scmp.ne.s32.totalorder %s32, %s33
      %p47 = scmp.eq.s32.totalorder %s25, 1
      %p48 = por %p46, %p47
      %p50 = scmp.ne.s32.totalorder %s33, %s49
      %p51 = scmp.eq.s32.totalorder %s25, 0
      %p52 = por %p50, %p51
      %s53 = ssub.s32 %s19, %s26
      %p54 = scmp.eq.s32.totalorder %s53, 0
      %s56 = sadd.s32 %s55, 1
      %s57 = scalar_select %p54, %s55, %s56
      %p60 = pneg %p54
      %p61 = scmp.eq.s32.totalorder %s19, 1
      %p62 = por %p60, %p61
      %p63 = scmp.ne.s32.totalorder %s55, %s58
      %p64 = scmp.eq.s32.totalorder %s19, 0
      %p65 = por %p63, %p64
      %p66 = scmp.ne.s32.totalorder %s55, %s58
      %p67 = scmp.eq.s32.totalorder %s24, 1
      %p68 = por %p66, %p67
      %p69 = scmp.ne.s32.totalorder %s58, %s59
      %p70 = scmp.eq.s32.totalorder %s24, 0
      %p71 = por %p69, %p70
      %p72 = scmp.ne.s32.totalorder %s58, %s59
      %p73 = scmp.eq.s32.totalorder %s25, 1
      %p74 = por %p72, %p73
      %p76 = scmp.ne.s32.totalorder %s59, %s75
      %p77 = scmp.eq.s32.totalorder %s25, 0
      %p78 = por %p76, %p77
      %s79 = ssub.s32 %s19, %s26
      %p80 = scmp.eq.s32.totalorder %s79, 0
      %s82 = sadd.s32 %s81, 1
      %s83 = scalar_select %p80, %s81, %s82
      %p86 = pneg %p80
      %p87 = scmp.eq.s32.totalorder %s19, 1
      %p88 = por %p86, %p87
      %p89 = scmp.ne.s32.totalorder %s81, %s84
      %p90 = scmp.eq.s32.totalorder %s19, 0
      %p91 = por %p89, %p90
      %p92 = scmp.ne.s32.totalorder %s81, %s84
      %p93 = scmp.eq.s32.totalorder %s24, 1
      %p94 = por %p92, %p93
      %p95 = scmp.ne.s32.totalorder %s84, %s85
      %p96 = scmp.eq.s32.totalorder %s24, 0
      %p97 = por %p95, %p96
      %p98 = scmp.ne.s32.totalorder %s84, %s85
      %p99 = scmp.eq.s32.totalorder %s25, 1
      %p100 = por %p98, %p99
      %p102 = scmp.ne.s32.totalorder %s85, %s101
      %p103 = scmp.eq.s32.totalorder %s25, 0
      %p104 = por %p102, %p103
      %s106 = sadd.s32 %s105, 1
      %p109 = scmp.eq.s32.totalorder %s19, 1
      %p110 = scmp.ne.s32.totalorder %s105, %s107
      %p111 = scmp.eq.s32.totalorder %s19, 0
      %p112 = por %p110, %p111
      %p113 = scmp.ne.s32.totalorder %s105, %s107
      %p114 = scmp.eq.s32.totalorder %s24, 1
      %p115 = por %p113, %p114
      %p116 = scmp.ne.s32.totalorder %s107, %s108
      %p117 = scmp.eq.s32.totalorder %s24, 0
      %p118 = por %p116, %p117
      %p119 = scmp.ne.s32.totalorder %s107, %s108
      %p120 = scmp.eq.s32.totalorder %s25, 1
      %p121 = por %p119, %p120
      %p123 = scmp.ne.s32.totalorder %s108, %s122
      %p124 = scmp.eq.s32.totalorder %s25, 0
      %p125 = por %p123, %p124
      %s127 = sadd.s32 %s126, 1
      %p130 = scmp.eq.s32.totalorder %s19, 1
      %p131 = scmp.ne.s32.totalorder %s126, %s128
      %p132 = scmp.eq.s32.totalorder %s19, 0
      %p133 = por %p131, %p132
      %p134 = scmp.ne.s32.totalorder %s126, %s128
      %p135 = scmp.eq.s32.totalorder %s24, 1
      %p136 = por %p134, %p135
      %p137 = scmp.ne.s32.totalorder %s128, %s129
      %p138 = scmp.eq.s32.totalorder %s24, 0
      %p139 = por %p137, %p138
      %p140 = scmp.ne.s32.totalorder %s128, %s129
      %p141 = scmp.eq.s32.totalorder %s25, 1
      %p142 = por %p140, %p141
      %p144 = scmp.ne.s32.totalorder %s129, %s143
      %p145 = scmp.eq.s32.totalorder %s25, 0
      %p146 = por %p144, %p145
      %s148 = sadd.s32 %s147, 1
      %p151 = scmp.eq.s32.totalorder %s19, 1
      %p152 = scmp.ne.s32.totalorder %s147, %s149
      %p153 = scmp.eq.s32.totalorder %s19, 0
      %p154 = por %p152, %p153
      %p155 = scmp.ne.s32.totalorder %s147, %s149
      %p156 = scmp.eq.s32.totalorder %s24, 1
      %p157 = por %p155, %p156
      %p158 = scmp.ne.s32.totalorder %s149, %s150
      %p159 = scmp.eq.s32.totalorder %s24, 0
      %p160 = por %p158, %p159
      %p161 = scmp.ne.s32.totalorder %s149, %s150
      %p162 = scmp.eq.s32.totalorder %s25, 1
      %p163 = por %p161, %p162
      %p165 = scmp.ne.s32.totalorder %s150, %s164
      %p166 = scmp.eq.s32.totalorder %s25, 0
      %p167 = por %p165, %p166
      %s169 = sadd.s32 %s168, 1
      %p172 = scmp.eq.s32.totalorder %s19, 1
      %p173 = scmp.ne.s32.totalorder %s168, %s170
      %p174 = scmp.eq.s32.totalorder %s19, 0
      %p175 = por %p173, %p174
      %p176 = scmp.ne.s32.totalorder %s168, %s170
      %p177 = scmp.eq.s32.totalorder %s24, 1
      %p178 = por %p176, %p177
      %p179 = scmp.ne.s32.totalorder %s170, %s171
      %p180 = scmp.eq.s32.totalorder %s24, 0
      %p181 = por %p179, %p180
      %p182 = scmp.ne.s32.totalorder %s170, %s171
      %p183 = scmp.eq.s32.totalorder %s25, 1
      %p184 = por %p182, %p183
      %p186 = scmp.ne.s32.totalorder %s171, %s185
      %p187 = scmp.eq.s32.totalorder %s25, 0
      %p188 = por %p186, %p187
      %s190 = sadd.s32 %s189, 1
      %p193 = scmp.eq.s32.totalorder %s19, 1
      %p194 = scmp.ne.s32.totalorder %s189, %s191
      %p195 = scmp.eq.s32.totalorder %s19, 0
      %p196 = por %p194, %p195
      %p197 = scmp.ne.s32.totalorder %s189, %s191
      %p198 = scmp.eq.s32.totalorder %s24, 1
      %p199 = por %p197, %p198
      %p200 = scmp.ne.s32.totalorder %s191, %s192
      %p201 = scmp.eq.s32.totalorder %s24, 0
      %p202 = por %p200, %p201
      %p203 = scmp.ne.s32.totalorder %s191, %s192
      %p204 = scmp.eq.s32.totalorder %s25, 1
      %p205 = por %p203, %p204
      %p207 = scmp.ne.s32.totalorder %s192, %s206
      %p208 = scmp.eq.s32.totalorder %s25, 0
      %p209 = por %p207, %p208
      %s210 = ssub.s32 %s19, %s26
      %p211 = scmp.eq.s32.totalorder %s210, 0
      %s213 = sadd.s32 %s212, 1
      %s214 = scalar_select %p211, %s212, %s213
      %p217 = pneg %p211
      %p218 = scmp.eq.s32.totalorder %s19, 1
      %p219 = por %p217, %p218
      %p220 = scmp.ne.s32.totalorder %s212, %s215
      %p221 = scmp.eq.s32.totalorder %s19, 0
      %p222 = por %p220, %p221
      %p223 = scmp.ne.s32.totalorder %s212, %s215
      %p224 = scmp.eq.s32.totalorder %s24, 1
      %p225 = por %p223, %p224
      %p226 = scmp.ne.s32.totalorder %s215, %s216
      %p227 = scmp.eq.s32.totalorder %s24, 0
      %p228 = por %p226, %p227
      %p229 = scmp.ne.s32.totalorder %s215, %s216
      %p230 = scmp.eq.s32.totalorder %s25, 1
      %p231 = por %p229, %p230
      %p233 = scmp.ne.s32.totalorder %s216, %s232
      %p234 = scmp.eq.s32.totalorder %s25, 0
      %p235 = por %p233, %p234
      %p236 = scmp.le.s32.totalorder 1, %s19
      %p237 = scmp.lt.s32.totalorder %s19, 3
      %p238 = pnand %p236, %p237
      %p239 = pneg %p238
      // Predicated region
      $region9: #{tpu_custom_call.1} parent=5 // pred_check
        _
      $region10: #{tpu_custom_call.1} parent=5 // pred_check_branch
        %241 = sbr.rel (%p238) target = $region12
      $region11: #{tpu_custom_call.1} parent=5 // pred_region
        %s242 = ssub.s32 %s19, 1
        // Predicated region
        $region13: #{tpu_custom_call.1} parent=11 // pred_check
          %p243 = pneg %p118
        $region14: #{tpu_custom_call.1} parent=11 // pred_check_branch
          %245 = sbr.rel (%p243) target = $region16
        $region15: #{tpu_custom_call.1} parent=11 // pred_region
          _
        $region16: #{tpu_custom_call.1} parent=11 // pred_fallthru
          _
        // Predicated region
        $region17: #{tpu_custom_call.1} parent=11 // pred_check
          %p246 = pneg %p139
        $region18: #{tpu_custom_call.1} parent=11 // pred_check_branch
          %248 = sbr.rel (%p246) target = $region20
        $region19: #{tpu_custom_call.1} parent=11 // pred_region
          _
        $region20: #{tpu_custom_call.1} parent=11 // pred_fallthru
          _
        // Predicated region
        $region21: #{tpu_custom_call.1} parent=11 // pred_check
          %p249 = pneg %p160
        $region22: #{tpu_custom_call.1} parent=11 // pred_check_branch
          %251 = sbr.rel (%p249) target = $region24
        $region23: #{tpu_custom_call.1} parent=11 // pred_region
          _
        $region24: #{tpu_custom_call.1} parent=11 // pred_fallthru
          _
        // Predicated region
        $region25: #{tpu_custom_call.1} parent=11 // pred_check
          %p252 = pneg %p181
        $region26: #{tpu_custom_call.1} parent=11 // pred_check_branch
          %254 = sbr.rel (%p252) target = $region28
        $region27: #{tpu_custom_call.1} parent=11 // pred_region
          _
        $region28: #{tpu_custom_call.1} parent=11 // pred_fallthru
          _
        // Predicated region
        $region29: #{tpu_custom_call.1} parent=11 // pred_check
          %p255 = pneg %p202
        $region30: #{tpu_custom_call.1} parent=11 // pred_check_branch
          %257 = sbr.rel (%p255) target = $region32
        $region31: #{tpu_custom_call.1} parent=11 // pred_region
          _
        $region32: #{tpu_custom_call.1} parent=11 // pred_fallthru
          _
      $region12: #{tpu_custom_call.1} parent=5 // pred_fallthru
        _
      %p258 = scmp.lt.s32.totalorder %s19, 2
      // Predicated region
      $region33: #{tpu_custom_call.1} parent=5 // pred_check
        %p259 = pneg %p258
      $region34: #{tpu_custom_call.1} parent=5 // pred_check_branch
        %261 = sbr.rel (%p259) target = $region36
      $region35: #{tpu_custom_call.1} parent=5 // pred_region
        // Predicated region
        $region37: #{tpu_custom_call.1} parent=35 // pred_check
          %p262 = pneg %p39
        $region38: #{tpu_custom_call.1} parent=35 // pred_check_branch
          %264 = sbr.rel (%p262) target = $region40
        $region39: #{tpu_custom_call.1} parent=35 // pred_region
          %p265 = scmp.lt.s32.totalorder %s19, 1
          %s266 = scalar_select %p265, %s19, 1
          %s267 = smul.addr %s266, 4
          %s268 = scalar_lea.vmem %s0, %s267
        $region40: #{tpu_custom_call.1} parent=35 // pred_fallthru
          _
        // Predicated region
        $region41: #{tpu_custom_call.1} parent=35 // pred_check
          %p269 = pneg %p65
        $region42: #{tpu_custom_call.1} parent=35 // pred_check_branch
          %271 = sbr.rel (%p269) target = $region44
        $region43: #{tpu_custom_call.1} parent=35 // pred_region
          %p272 = scmp.lt.s32.totalorder %s19, 1
          %s273 = scalar_select %p272, %s19, 1
          %s274 = smul.addr %s273, 4
          %s275 = scalar_lea.vmem %s1, %s274
        $region44: #{tpu_custom_call.1} parent=35 // pred_fallthru
          _
        // Predicated region
        $region45: #{tpu_custom_call.1} parent=35 // pred_check
          %p276 = pneg %p91
        $region46: #{tpu_custom_call.1} parent=35 // pred_check_branch
          %278 = sbr.rel (%p276) target = $region48
        $region47: #{tpu_custom_call.1} parent=35 // pred_region
          %p279 = scmp.lt.s32.totalorder %s19, 1
          %s280 = scalar_select %p279, %s19, 1
          %s281 = smul.addr %s280, 4
          %s282 = scalar_lea.vmem %s2, %s281
        $region48: #{tpu_custom_call.1} parent=35 // pred_fallthru
          _
      $region36: #{tpu_custom_call.1} parent=5 // pred_fallthru
        _
      %p283 = scmp.le.s32.totalorder 1, %s19
      %p284 = scmp.lt.s32.totalorder %s19, 3
      %p285 = pnand %p283, %p284
      %p286 = pneg %p285
      // Predicated region
      $region49: #{tpu_custom_call.1} parent=5 // pred_check
        _
      $region50: #{tpu_custom_call.1} parent=5 // pred_check_branch
        %288 = sbr.rel (%p285) target = $region52
      $region51: #{tpu_custom_call.1} parent=5 // pred_region
        %s289 = ssub.s32 %s19, 1
        %p290 = scmp.lt.s32.totalorder %s24, 1
        %s291 = scalar_select %p290, %s24, 1
        %s292 = smul.addr %s291, 4
        %s293 = scalar_lea.vmem %s0, %s292
        %p294 = pneg %p45
        %p295 = pneg %p42
        %p296 = scmp.lt.s32.totalorder %s24, 1
        %s297 = scalar_select %p296, %s24, 1
        %s298 = smul.addr %s297, 4
        %s299 = scalar_lea.vmem %s1, %s298
        %p300 = pneg %p71
        %p301 = pneg %p68
        %p302 = scmp.lt.s32.totalorder %s24, 1
        %s303 = scalar_select %p302, %s24, 1
        %s304 = smul.addr %s303, 4
        %s305 = scalar_lea.vmem %s2, %s304
        %p306 = pneg %p97
        %p307 = pneg %p94
        %p308 = pneg %p118
        %p309 = pneg %p115
        %p310 = pneg %p139
        %p311 = pneg %p136
        %p312 = pneg %p160
        %p313 = pneg %p157
        %p314 = pneg %p181
        %p315 = pneg %p178
        %p316 = pneg %p202
        %p317 = pneg %p199
        %p318 = pneg %p228
        %p319 = pneg %p225
        %s320 = sand.u32 %s215, 1
        %s321 = scalar_lea.sflag [#allocation4], %s320
        %s322 = sand.u32 %s215, 1
        %s323 = smul.addr %s322, 4
        %s324 = scalar_lea.vmem [#allocation3], %s323
        %p325 = scmp.lt.s32.totalorder %s24, 1
        %s326 = scalar_select %p325, %s24, 1
        %s327 = smul.addr %s326, 4
        %s328 = scalar_lea.vmem %s0, %s327
        %p329 = scmp.lt.s32.totalorder %s24, 1
        %s330 = scalar_select %p329, %s24, 1
        %s331 = smul.addr %s330, 4
        %s332 = scalar_lea.vmem %s1, %s331
        %p333 = scmp.lt.s32.totalorder %s24, 1
        %s334 = scalar_select %p333, %s24, 1
        %s335 = smul.addr %s334, 4
        %s336 = scalar_lea.vmem %s2, %s335
        %v337 = vld [vmem:[%s328] sm:$0xf]
        %v338 = vld [vmem:[%s332] sm:$0xf]
        %v339 = vld [vmem:[%s3] sm:$0xff]
        %v340 = vld [vmem:[%s3 + $0x8] sm:$0xff]
        %v341 = vld [vmem:[%s3 + $0x10] sm:$0xff]
        %v342 = vld [vmem:[%s3 + $0x18] sm:$0xff]
        %v343 = vld [vmem:[%s3 + $0x20] sm:$0xff]
        %v344 = vld [vmem:[%s3 + $0x28] sm:$0xff]
        %v345 = vld [vmem:[%s3 + $0x30] sm:$0xff]
        %v346 = vld [vmem:[%s3 + $0x38] sm:$0xff]
        %v347 = vld [vmem:[%s4] sm:$0xff]
        %v348 = vld [vmem:[%s4 + $0x8] sm:$0xff]
        %v349 = vld [vmem:[%s4 + $0x10] sm:$0xff]
        %v350 = vld [vmem:[%s4 + $0x18] sm:$0xff]
        %v351 = vld [vmem:[%s4 + $0x20] sm:$0xff]
        %v352 = vld [vmem:[%s4 + $0x28] sm:$0xff]
        %v353 = vld [vmem:[%s4 + $0x30] sm:$0xff]
        %v354 = vld [vmem:[%s4 + $0x38] sm:$0xff]
        %vm355 = vcmask 31744
        %v357 = vsel %vm355, %v347, 0
        %v360 = vsel %vm355, %v348, 0
        %v363 = vsel %vm355, %v349, 0
        %v366 = vsel %vm355, %v350, 0
        %v369 = vsel %vm355, %v351, 0
        %v372 = vsel %vm355, %v352, 0
        %v375 = vsel %vm355, %v353, 0
        %v378 = vsel %vm355, %v354, 0
        %vm380 = vcmask 1043456
        %v382 = vsel %vm380, %v338, 0
        %384 = vmatprep.subr.mxu0 0.0
        %385 = vmatpush1.msra.mxu0 %v382
        %386 = vmatprep.subr.mxu0 0.0
        %387 = vmatpush1.msra.mxu0 0.0
        %388 = vmatprep.subr.mxu0 0.0
        %389 = vmatpush1.msra.mxu0 0.0
        %390 = vmatprep.subr.mxu0 0.0
        %391 = vmatpush1.msra.mxu0 0.0
        %392 = vmatprep.subr.mxu0 0.0
        %393 = vmatpush1.msra.mxu0 0.0
        %394 = vmatprep.subr.mxu0 0.0
        %395 = vmatpush1.msra.mxu0 0.0
        %396 = vmatprep.subr.mxu0 0.0
        %397 = vmatpush1.msra.mxu0 0.0
        %398 = vmatprep.subr.mxu0 0.0
        %399 = vmatpush1.msra.mxu0 0.0
        %400 = vmatprep.subr.mxu0 0.0
        %401 = vmatpush1.msra.mxu0 0.0
        %402 = vmatprep.subr.mxu0 0.0
        %403 = vmatpush1.msra.mxu0 0.0
        %404 = vmatprep.subr.mxu0 0.0
        %405 = vmatpush1.msra.mxu0 0.0
        %406 = vmatprep.subr.mxu0 0.0
        %407 = vmatpush1.msra.mxu0 0.0
        %408 = vmatprep.subr.mxu0 0.0
        %409 = vmatpush1.msra.mxu0 0.0
        %410 = vmatprep.subr.mxu0 0.0
        %411 = vmatpush1.msra.mxu0 0.0
        %412 = vmatprep.subr.mxu0 0.0
        %413 = vmatpush1.msra.mxu0 0.0
        %414 = vmatprep.subr.mxu0 0.0
        %415 = vmatpush1.msra.mxu0 0.0
        %416 = vmatprep.subr.mxu0 0.0
        %417 = vmatpush1.msra.mxu0 0.0
        %418 = vmatprep.subr.mxu0 0.0
        %419 = vmatpush1.msra.mxu0 0.0
        %420 = vmatprep.subr.mxu0 0.0
        %421 = vmatpush1.msra.mxu0 0.0
        %422 = vmatprep.subr.mxu0 0.0
        %423 = vmatpush1.msra.mxu0 0.0
        %424 = vmatprep.subr.mxu0 0.0
        %425 = vmatpush1.msra.mxu0 0.0
        %426 = vmatprep.subr.mxu0 0.0
        %427 = vmatpush1.msra.mxu0 0.0
        %428 = vmatprep.subr.mxu0 0.0
        %429 = vmatpush1.msra.mxu0 0.0
        %430 = vmatprep.subr.mxu0 0.0
        %431 = vmatpush1.msra.mxu0 0.0
        %432 = vmatprep.subr.mxu0 0.0
        %433 = vmatpush1.msra.mxu0 0.0
        %434 = vmatprep.subr.mxu0 0.0
        %435 = vmatpush1.msra.mxu0 0.0
        %436 = vmatprep.subr.mxu0 0.0
        %437 = vmatpush1.msra.mxu0 0.0
        %438 = vmatprep.subr.mxu0 0.0
        %439 = vmatpush1.msra.mxu0 0.0
        %440 = vmatprep.subr.mxu0 0.0
        %441 = vmatpush1.msra.mxu0 0.0
        %442 = vmatprep.subr.mxu0 0.0
        %443 = vmatpush1.msra.mxu0 0.0
        %444 = vmatprep.subr.mxu0 0.0
        %445 = vmatpush1.msra.mxu0 0.0
        %446 = vmatprep.subr.mxu0 0.0
        %447 = vmatpush1.msra.mxu0 0.0
        %448 = vmatprep.mubr.f32.mxu0 0.0
        %449 = vmatmul.mubr.f32.gmra.mrb[0].mxu0 %v357
        %v450 = vpop.f32.mrb[0].mxu0
        %v451 = vadd.f32 0.0, %v450
        %v452 = vpop.f32.mrb[0].mxu0
        %453 = vmatprep.mubr.f32.mxu0 0.0
        %454 = vmatmul.mubr.f32.gmra.mrb[0].mxu0 %v360
        %v455 = vpop.f32.mrb[0].mxu0
        %v456 = vadd.f32 0.0, %v455
        %v457 = vpop.f32.mrb[0].mxu0
        %458 = vmatprep.mubr.f32.mxu0 0.0
        %459 = vmatmul.mubr.f32.gmra.mrb[0].mxu0 %v363
        %v460 = vpop.f32.mrb[0].mxu0
        %v461 = vadd.f32 0.0, %v460
        %v462 = vpop.f32.mrb[0].mxu0
        %463 = vmatprep.mubr.f32.mxu0 0.0
        %464 = vmatmul.mubr.f32.gmra.mrb[0].mxu0 %v366
        %v465 = vpop.f32.mrb[0].mxu0
        %v466 = vadd.f32 0.0, %v465
        %v467 = vpop.f32.mrb[0].mxu0
        %468 = vmatprep.mubr.f32.mxu0 0.0
        %469 = vmatmul.mubr.f32.gmra.mrb[0].mxu0 %v369
        %v470 = vpop.f32.mrb[0].mxu0
        %v471 = vadd.f32 0.0, %v470
        %v472 = vpop.f32.mrb[0].mxu0
        %473 = vmatprep.mubr.f32.mxu0 0.0
        %474 = vmatmul.mubr.f32.gmra.mrb[0].mxu0 %v372
        %v475 = vpop.f32.mrb[0].mxu0
        %v476 = vadd.f32 0.0, %v475
        %v477 = vpop.f32.mrb[0].mxu0
        %478 = vmatprep.mubr.f32.mxu0 0.0
        %479 = vmatmul.mubr.f32.gmra.mrb[0].mxu0 %v375
        %v480 = vpop.f32.mrb[0].mxu0
        %v481 = vadd.f32 0.0, %v480
        %v482 = vpop.f32.mrb[0].mxu0
        %483 = vmatprep.mubr.f32.mxu0 0.0
        %484 = vmatmul.mubr.f32.gmra.mrb[0].mxu0 %v378
        %v485 = vpop.f32.mrb[0].mxu0
        %v486 = vadd.f32 0.0, %v485
        %v487 = vpop.f32.mrb[0].mxu0
        %488 = vdwg.mxu0
        %v490 = vsel %vm355, %v339, 0
        %v493 = vsel %vm355, %v340, 0
        %v496 = vsel %vm355, %v341, 0
        %v499 = vsel %vm355, %v342, 0
        %v502 = vsel %vm355, %v343, 0
        %v505 = vsel %vm355, %v344, 0
        %v508 = vsel %vm355, %v345, 0
        %v511 = vsel %vm355, %v346, 0
        %v514 = vsel %vm380, %v337, 0
        %516 = vmatprep.subr.mxu0 0.0
        %517 = vmatpush1.msra.mxu0 %v514
        %518 = vmatprep.subr.mxu0 0.0
        %519 = vmatpush1.msra.mxu0 0.0
        %520 = vmatprep.subr.mxu0 0.0
        %521 = vmatpush1.msra.mxu0 0.0
        %522 = vmatprep.subr.mxu0 0.0
        %523 = vmatpush1.msra.mxu0 0.0
        %524 = vmatprep.subr.mxu0 0.0
        %525 = vmatpush1.msra.mxu0 0.0
        %526 = vmatprep.subr.mxu0 0.0
        %527 = vmatpush1.msra.mxu0 0.0
        %528 = vmatprep.subr.mxu0 0.0
        %529 = vmatpush1.msra.mxu0 0.0
        %530 = vmatprep.subr.mxu0 0.0
        %531 = vmatpush1.msra.mxu0 0.0
        %532 = vmatprep.subr.mxu0 0.0
        %533 = vmatpush1.msra.mxu0 0.0
        %534 = vmatprep.subr.mxu0 0.0
        %535 = vmatpush1.msra.mxu0 0.0
        %536 = vmatprep.subr.mxu0 0.0
        %537 = vmatpush1.msra.mxu0 0.0
        %538 = vmatprep.subr.mxu0 0.0
        %539 = vmatpush1.msra.mxu0 0.0
        %540 = vmatprep.subr.mxu0 0.0
        %541 = vmatpush1.msra.mxu0 0.0
        %542 = vmatprep.subr.mxu0 0.0
        %543 = vmatpush1.msra.mxu0 0.0
        %544 = vmatprep.subr.mxu0 0.0
        %545 = vmatpush1.msra.mxu0 0.0
        %546 = vmatprep.subr.mxu0 0.0
        %547 = vmatpush1.msra.mxu0 0.0
        %548 = vmatprep.subr.mxu0 0.0
        %549 = vmatpush1.msra.mxu0 0.0
        %550 = vmatprep.subr.mxu0 0.0
        %551 = vmatpush1.msra.mxu0 0.0
        %552 = vmatprep.subr.mxu0 0.0
        %553 = vmatpush1.msra.mxu0 0.0
        %554 = vmatprep.subr.mxu0 0.0
        %555 = vmatpush1.msra.mxu0 0.0
        %556 = vmatprep.subr.mxu0 0.0
        %557 = vmatpush1.msra.mxu0 0.0
        %558 = vmatprep.subr.mxu0 0.0
        %559 = vmatpush1.msra.mxu0 0.0
        %560 = vmatprep.subr.mxu0 0.0
        %561 = vmatpush1.msra.mxu0 0.0
        %562 = vmatprep.subr.mxu0 0.0
        %563 = vmatpush1.msra.mxu0 0.0
        %564 = vmatprep.subr.mxu0 0.0
        %565 = vmatpush1.msra.mxu0 0.0
        %566 = vmatprep.subr.mxu0 0.0
        %567 = vmatpush1.msra.mxu0 0.0
        %568 = vmatprep.subr.mxu0 0.0
        %569 = vmatpush1.msra.mxu0 0.0
        %570 = vmatprep.subr.mxu0 0.0
        %571 = vmatpush1.msra.mxu0 0.0
        %572 = vmatprep.subr.mxu0 0.0
        %573 = vmatpush1.msra.mxu0 0.0
        %574 = vmatprep.subr.mxu0 0.0
        %575 = vmatpush1.msra.mxu0 0.0
        %576 = vmatprep.subr.mxu0 0.0
        %577 = vmatpush1.msra.mxu0 0.0
        %578 = vmatprep.subr.mxu0 0.0
        %579 = vmatpush1.msra.mxu0 0.0
        %580 = vmatprep.mubr.f32.mxu0 0.0
        %581 = vmatmul.mubr.f32.gmra.mrb[0].mxu0 %v490
        %v582 = vpop.f32.mrb[0].mxu0
        %v583 = vadd.f32 %v451, %v582
        %v584 = vpop.f32.mrb[0].mxu0
        %585 = vmatprep.mubr.f32.mxu0 0.0
        %586 = vmatmul.mubr.f32.gmra.mrb[0].mxu0 %v493
        %v587 = vpop.f32.mrb[0].mxu0
        %v588 = vadd.f32 %v456, %v587
        %v589 = vpop.f32.mrb[0].mxu0
        %590 = vmatprep.mubr.f32.mxu0 0.0
        %591 = vmatmul.mubr.f32.gmra.mrb[0].mxu0 %v496
        %v592 = vpop.f32.mrb[0].mxu0
        %v593 = vadd.f32 %v461, %v592
        %v594 = vpop.f32.mrb[0].mxu0
        %595 = vmatprep.mubr.f32.mxu0 0.0
        %596 = vmatmul.mubr.f32.gmra.mrb[0].mxu0 %v499
        %v597 = vpop.f32.mrb[0].mxu0
        %v598 = vadd.f32 %v466, %v597
        %v599 = vpop.f32.mrb[0].mxu0
        %600 = vmatprep.mubr.f32.mxu0 0.0
        %601 = vmatmul.mubr.f32.gmra.mrb[0].mxu0 %v502
        %v602 = vpop.f32.mrb[0].mxu0
        %v603 = vadd.f32 %v471, %v602
        %v604 = vpop.f32.mrb[0].mxu0
        %605 = vmatprep.mubr.f32.mxu0 0.0
        %606 = vmatmul.mubr.f32.gmra.mrb[0].mxu0 %v505
        %v607 = vpop.f32.mrb[0].mxu0
        %v608 = vadd.f32 %v476, %v607
        %v609 = vpop.f32.mrb[0].mxu0
        %610 = vmatprep.mubr.f32.mxu0 0.0
        %611 = vmatmul.mubr.f32.gmra.mrb[0].mxu0 %v508
        %v612 = vpop.f32.mrb[0].mxu0
        %v613 = vadd.f32 %v481, %v612
        %v614 = vpop.f32.mrb[0].mxu0
        %615 = vmatprep.mubr.f32.mxu0 0.0
        %616 = vmatmul.mubr.f32.gmra.mrb[0].mxu0 %v511
        %v617 = vpop.f32.mrb[0].mxu0
        %v618 = vadd.f32 %v486, %v617
        %v619 = vpop.f32.mrb[0].mxu0
        %620 = vdwg.mxu0
        %v621 = vld [vmem:[%s5] sm:$0xff]
        %v622 = vld [vmem:[%s5 + $0x8] sm:$0xff]
        %v623 = vld [vmem:[%s5 + $0x10] sm:$0xff]
        %v624 = vld [vmem:[%s5 + $0x18] sm:$0xff]
        %v625 = vld [vmem:[%s5 + $0x20] sm:$0xff]
        %v626 = vld [vmem:[%s5 + $0x28] sm:$0xff]
        %v627 = vld [vmem:[%s5 + $0x30] sm:$0xff]
        %v628 = vld [vmem:[%s5 + $0x38] sm:$0xff]
        %v629 = vadd.f32 %v583, %v621
        %v630 = vadd.f32 %v588, %v622
        %v631 = vadd.f32 %v593, %v623
        %v632 = vadd.f32 %v598, %v624
        %v633 = vadd.f32 %v603, %v625
        %v634 = vadd.f32 %v608, %v626
        %v635 = vadd.f32 %v613, %v627
        %v636 = vadd.f32 %v618, %v628
        %v637 = vmax.f32 %v629, 0.0
        %v638 = vmax.f32 %v630, 0.0
        %v639 = vmax.f32 %v631, 0.0
        %v640 = vmax.f32 %v632, 0.0
        %v641 = vmax.f32 %v633, 0.0
        %v642 = vmax.f32 %v634, 0.0
        %v643 = vmax.f32 %v635, 0.0
        %v644 = vmax.f32 %v636, 0.0
        %v645 = vld [vmem:[%s6] sm:$0x1]
        %v646 = vld [vmem:[#allocation2] sm:$0x1]
        %648 = vset.pattern.permute.xlu0 0
        %649 = vperm.xlu0 %648, %v646
        %v650 = vpop.permute.xlu0 %649
        %v652 = vlaneseq
        %v653 = vshrl.u32 %v652, 7
        %v654 = vsub.s32 0, %v653
        %v655 = vrot.slane %v650, %v654
        %vm656 = vcmask 523264
        %v658 = vsel %vm656, %v645, 0
        %660 = vmatprep.subr.mxu0 0.0
        %661 = vmatpush1.msra.mxu0 %v637
        %662 = vmatprep.subr.mxu0 0.0
        %663 = vmatpush1.msra.mxu0 %v638
        %664 = vmatprep.subr.mxu0 0.0
        %665 = vmatpush1.msra.mxu0 %v639
        %666 = vmatprep.subr.mxu0 0.0
        %667 = vmatpush1.msra.mxu0 %v640
        %668 = vmatprep.subr.mxu0 0.0
        %669 = vmatpush1.msra.mxu0 %v641
        %670 = vmatprep.subr.mxu0 0.0
        %671 = vmatpush1.msra.mxu0 %v642
        %672 = vmatprep.subr.mxu0 0.0
        %673 = vmatpush1.msra.mxu0 %v643
        %674 = vmatprep.subr.mxu0 0.0
        %675 = vmatpush1.msra.mxu0 %v644
        %676 = vmatprep.subr.mxu0 0.0
        %677 = vmatpush1.msra.mxu0 0.0
        %678 = vmatprep.subr.mxu0 0.0
        %679 = vmatpush1.msra.mxu0 0.0
        %680 = vmatprep.subr.mxu0 0.0
        %681 = vmatpush1.msra.mxu0 0.0
        %682 = vmatprep.subr.mxu0 0.0
        %683 = vmatpush1.msra.mxu0 0.0
        %684 = vmatprep.subr.mxu0 0.0
        %685 = vmatpush1.msra.mxu0 0.0
        %686 = vmatprep.subr.mxu0 0.0
        %687 = vmatpush1.msra.mxu0 0.0
        %688 = vmatprep.subr.mxu0 0.0
        %689 = vmatpush1.msra.mxu0 0.0
        %690 = vmatprep.subr.mxu0 0.0
        %691 = vmatpush1.msra.mxu0 0.0
        %692 = vmatprep.subr.mxu0 0.0
        %693 = vmatpush1.msra.mxu0 0.0
        %694 = vmatprep.subr.mxu0 0.0
        %695 = vmatpush1.msra.mxu0 0.0
        %696 = vmatprep.subr.mxu0 0.0
        %697 = vmatpush1.msra.mxu0 0.0
        %698 = vmatprep.subr.mxu0 0.0
        %699 = vmatpush1.msra.mxu0 0.0
        %700 = vmatprep.subr.mxu0 0.0
        %701 = vmatpush1.msra.mxu0 0.0
        %702 = vmatprep.subr.mxu0 0.0
        %703 = vmatpush1.msra.mxu0 0.0
        %704 = vmatprep.subr.mxu0 0.0
        %705 = vmatpush1.msra.mxu0 0.0
        %706 = vmatprep.subr.mxu0 0.0
        %707 = vmatpush1.msra.mxu0 0.0
        %708 = vmatprep.subr.mxu0 0.0
        %709 = vmatpush1.msra.mxu0 0.0
        %710 = vmatprep.subr.mxu0 0.0
        %711 = vmatpush1.msra.mxu0 0.0
        %712 = vmatprep.subr.mxu0 0.0
        %713 = vmatpush1.msra.mxu0 0.0
        %714 = vmatprep.subr.mxu0 0.0
        %715 = vmatpush1.msra.mxu0 0.0
        %716 = vmatprep.subr.mxu0 0.0
        %717 = vmatpush1.msra.mxu0 0.0
        %718 = vmatprep.subr.mxu0 0.0
        %719 = vmatpush1.msra.mxu0 0.0
        %720 = vmatprep.subr.mxu0 0.0
        %721 = vmatpush1.msra.mxu0 0.0
        %722 = vmatprep.subr.mxu0 0.0
        %723 = vmatpush1.msra.mxu0 0.0
        %724 = vmatprep.mubr.f32.mxu0 0.0
        %725 = vmatmul.mubr.f32.gmra.mrb[0].mxu0 %v658
        %v726 = vpop.f32.mrb[0].mxu0
        %v727 = vadd.f32 %v655, %v726
        %v728 = vpop.f32.mrb[0].mxu0
        %729 = vdwg.mxu0
        %v730 = vxor.u32 %v727, 2147483648
        %v731 = vmul.f32 %v730, 1.442695
        %v732 = vpow.pop %v731
        %v733 = vadd.f32 %v732, 1.0
        %v734 = vrcp.pop %v733
        %v735 = vmul.f32 1.0, %v734
        %v736 = vld [vmem:[%s336] sm:$0x7]
        %v737 = vlaneseq
        %v738 = vshrl.u32 %v737, 7
        %v739 = vsub.s32 0, %v738
        %v740 = vrot.slane %v735, %v739
        %v741 = vmul.f32 %v736, %v740
        %742 = vst [vmem:[%s324] sm:$0x7] %v741
        %s743 = sand.u32 %s215, 1
        %s744 = scalar_lea.sflag [#allocation4], %s743
        %s745 = sand.u32 %s215, 1
        %s746 = smul.addr %s745, 4
        %s747 = scalar_lea.vmem [#allocation3], %s746
        // Predicated region
        $region53: #{tpu_custom_call.1} parent=51 // pred_check
          %p748 = pneg %p225
        $region54: #{tpu_custom_call.1} parent=51 // pred_check_branch
          %750 = sbr.rel (%p748) target = $region56
        $region55: #{tpu_custom_call.1} parent=51 // pred_region
          %s752 = ssub.s32 64, 64
          %753 = vsyncadd %s744, %s752
          %s754 = smul.addr %s24, 64
          %s755 = scalar_lea.hbm %s8, %s754
          %s757 = sshll.u32 %s747, 4
          %s758 = int_to_ptr.vmem [resolvable:$true] %s757
          %760 = dma.vmem_to_hbm [thread:$0]  %s758, 64, %s755, %s744
        $region56: #{tpu_custom_call.1} parent=51 // pred_fallthru
          _
      $region52: #{tpu_custom_call.1} parent=5 // pred_fallthru
        _
      %p761 = scmp.le.s32.totalorder 2, %s19
      // Predicated region
      $region57: #{tpu_custom_call.1} parent=5 // pred_check
        %p762 = pneg %p761
      $region58: #{tpu_custom_call.1} parent=5 // pred_check_branch
        %764 = sbr.rel (%p762) target = $region60
      $region59: #{tpu_custom_call.1} parent=5 // pred_region
        %s765 = ssub.s32 %s19, 2
        // Predicated region
        $region61: #{tpu_custom_call.1} parent=59 // pred_check
          %p766 = pneg %p231
        $region62: #{tpu_custom_call.1} parent=59 // pred_check_branch
          %768 = sbr.rel (%p766) target = $region64
        $region63: #{tpu_custom_call.1} parent=59 // pred_region
          %s769 = sand.u32 %s216, 1
          %s770 = scalar_lea.sflag [#allocation4], %s769
          %s771 = sand.u32 %s216, 1
          %s772 = smul.addr %s771, 4
          %s773 = scalar_lea.vmem [#allocation3], %s772
          %774 = dma.done %s770, 64
        $region64: #{tpu_custom_call.1} parent=59 // pred_fallthru
          _
      $region60: #{tpu_custom_call.1} parent=5 // pred_fallthru
        _
    $region6: #{tpu_custom_call.1} parent=1 // loop_footer
      %s23 = sadd.s32 1, %s19
    $region7: #{tpu_custom_call.1} parent=1 // loop_footer_branch
      %18 = sbr.rel target = $region3
    $region8: #{tpu_custom_call.1} parent=1 // loop_exit
      _
    %775 = vsyncpa [#allocation4], 1
    %s776 = scalar_lea.sflag [#allocation4], 1
    %777 = vsyncpa %s776, 1

</llo_original>
